<compile_context>
chip_gen: v5e
topology: v5e:2x2
jax: 0.10.0
libtpu: 0.0.40
codegen_flags: <defaults>
</compile_context>

<pallas_src>
import functools

import jax
import jax.numpy as jnp
from jax.experimental import pallas as pl
from jax.experimental.pallas import tpu as pltpu


def _round_up(x, mult):
    return ((x + mult - 1) // mult) * mult


def _cosface_kernel(cos_ref, lab_ref, out_ref, *, s, m, col_tile):
    # cos_ref: (TR, TC) input tile, lab_ref: (TR, 1) int32, out_ref: (TR, TC).
    cos = cos_ref[...].astype(jnp.float32)                  # f32 math for parity
    # Column axis is the OUTER grid axis: shift the label instead of the iota
    # (a (TR,1) subtract replaces a full-tile add).
    rel = lab_ref[...] - pl.program_id(0) * col_tile        # (TR, 1) int32
    hit = jax.lax.broadcasted_iota(jnp.int32, cos.shape, 1) == rel
    # Un-folded form matches the reference bit-for-bit: (cos - m*hit) * s.
    out = (cos - jnp.where(hit, jnp.float32(m), jnp.float32(0.0))) * jnp.float32(s)
    out_ref[...] = out.astype(out_ref.dtype)


def cosface(cosine, label, s=64.0, m=0.4, *, row_tile=256, buf_bytes=8 << 20):
    """cosine: (N, C) float, label: (N,) int (label == -1 means 'no margin')."""
    n, c = cosine.shape
    itemsize = cosine.dtype.itemsize

    # Byte-based tile selection: ~buf_bytes per VMEM buffer, (8, 128)-aligned.
    tr = min(row_tile, _round_up(n, 8))
    tc_target = max(128, ((buf_bytes // (tr * itemsize)) // 128) * 128)
    tc = min(tc_target, _round_up(c, 128))

    lab2d = label.astype(jnp.int32).reshape(n, 1)

    # Column axis outermost (many blocks -> megacore sharding on v7x even for
    # small N); partial boundary blocks are masked by Pallas, no padding/slice.
    grid = (pl.cdiv(c, tc), pl.cdiv(n, tr))

    # Working set: double-buffered input + output tiles + tiny label slab.
    work = 2 * (2 * tr * tc * itemsize) + 2 * tr * 4
    vmem_limit = int(min(48 << 20, max(16 << 20, work + (8 << 20))))

    kernel = functools.partial(
        _cosface_kernel, s=float(s), m=float(m), col_tile=tc)

    return pl.pallas_call(
        kernel,
        out_shape=jax.ShapeDtypeStruct((n, c), cosine.dtype),
        grid_spec=pltpu.PrefetchScalarGridSpec(
            num_scalar_prefetch=0,
            grid=grid,
            in_specs=[
                pl.BlockSpec((tr, tc), lambda j, i: (i, j)),
                pl.BlockSpec((tr, 1), lambda j, i: (i, 0)),
            ],
            out_specs=pl.BlockSpec((tr, tc), lambda j, i: (i, j)),
        ),
        # Apply margin + scale in place on the logits buffer when donated.
        input_output_aliases={0: 0},
        cost_estimate=pl.CostEstimate(
            flops=3 * n * c,
            transcendentals=0,
            bytes_accessed=2 * n * c * itemsize + n * 4,
        ),
        compiler_params=pltpu.CompilerParams(
            dimension_semantics=("parallel", "parallel"),
            vmem_limit_bytes=vmem_limit,
        ),
    )(cosine, lab2d)


def cosface_ref(cosine, label, s=64.0, m=0.4):
    """Pure-JAX reference mirroring the PyTorch forward."""
    n, c = cosine.shape
    col = jnp.arange(c)[None, :]
    lab = label[:, None]
    hit = (col == lab) & (lab != -1)
    return (cosine - jnp.where(hit, m, 0.0)) * s


if __name__ == "__main__":
    key = jax.random.PRNGKey(0)
    k1, k2, k3 = jax.random.split(key, 3)

    batch, num_classes = 8, 512
    cosine = jax.random.uniform(k1, (batch, num_classes),
                                dtype=jnp.float32, minval=-1.0, maxval=1.0)
    label = jax.random.randint(k2, (batch,), 0, num_classes, dtype=jnp.int32)
    # Mark a couple of rows as "ignore" (-1), as the module supports.
    drop = jax.random.bernoulli(k3, 0.25, (batch,))
    label = jnp.where(drop, -1, label)

    # Compute the reference first (the kernel call aliases its input buffer).
    ref = cosface_ref(cosine, label)

    out = cosface(cosine, label)
    jax.block_until_ready(out)

    assert out.shape == ref.shape, "shape mismatch vs reference"
    assert jnp.allclose(out, ref, atol=1e-5, rtol=1e-5), "mismatch vs reference"

    print("KERNEL_OK")
</pallas_src>

<mosaic_0001>
module attributes {stable_mosaic.version = 11 : i64} {
  func.func @_cosface_kernel(%arg0: i32, %arg1: i32, %arg2: memref<8x512xf32, #tpu.memory_space<vmem>>, %arg3: memref<8x1xi32, #tpu.memory_space<vmem>>, %arg4: memref<8x512xf32, #tpu.memory_space<vmem>>) attributes {dimension_semantics = [#tpu.dimension_semantics<parallel>, #tpu.dimension_semantics<parallel>], iteration_bounds = array<i64: 1, 1>, scalar_prefetch = 0 : i64, scratch_operands = 0 : i64, tpu.core_type = #tpu.core_type<tc>, window_params = [{transform_indices = @transform_0, window_bounds = array<i64: 8, 512>}, {transform_indices = @transform_1, window_bounds = array<i64: 8, 1>}, {transform_indices = @transform_2, window_bounds = array<i64: 8, 512>}]} {
    %c0 = arith.constant 0 : index
    %c0_0 = arith.constant 0 : index
    %0 = vector.load %arg2[%c0, %c0_0] : memref<8x512xf32, #tpu.memory_space<vmem>>, vector<8x512xf32>
    %c0_1 = arith.constant 0 : index
    %c0_2 = arith.constant 0 : index
    %1 = vector.load %arg3[%c0_1, %c0_2] : memref<8x1xi32, #tpu.memory_space<vmem>>, vector<8x1xi32>
    %c512_i32 = arith.constant 512 : i32
    %2 = arith.muli %arg0, %c512_i32 : i32
    %3 = vector.broadcast %2 : i32 to vector<8x1xi32>
    %4 = arith.subi %1, %3 : vector<8x1xi32>
    %5 = tpu.iota {dimensions = array<i32: 1>} : vector<8x512xi32>
    %6 = vector.broadcast %4 : vector<8x1xi32> to vector<8x512xi32>
    %7 = arith.cmpi eq, %5, %6 : vector<8x512xi32>
    %cst = arith.constant 4.000000e-01 : f32
    %cst_3 = arith.constant 0.000000e+00 : f32
    %8 = vector.broadcast %cst : f32 to vector<8x512xf32>
    %9 = vector.broadcast %cst_3 : f32 to vector<8x512xf32>
    %10 = arith.select %7, %8, %9 : vector<8x512xi1>, vector<8x512xf32>
    %11 = arith.subf %0, %10 : vector<8x512xf32>
    %cst_4 = arith.constant 6.400000e+01 : f32
    %12 = vector.broadcast %cst_4 : f32 to vector<8x512xf32>
    %13 = arith.mulf %11, %12 : vector<8x512xf32>
    %c0_5 = arith.constant 0 : index
    %c0_6 = arith.constant 0 : index
    %14 = vector.load %arg4[%c0_5, %c0_6] : memref<8x512xf32, #tpu.memory_space<vmem>>, vector<8x512xf32>
    tpu.vector_store %arg4[%c0_5, %c0_6], %13 {strides = array<i32>} : memref<8x512xf32, #tpu.memory_space<vmem>>, vector<8x512xf32>,
    return
  }
  func.func @transform_0(%arg0: i32, %arg1: i32) -> (i32, i32) {
    %c0_i32 = arith.constant 0 : i32
    return %arg1, %arg0 : i32, i32
  }
  func.func @transform_1(%arg0: i32, %arg1: i32) -> (i32, i32) {
    %c0_i32 = arith.constant 0 : i32
    %c0_i32_0 = arith.constant 0 : i32
    return %arg1, %c0_i32 : i32, i32
  }
  func.func @transform_2(%arg0: i32, %arg1: i32) -> (i32, i32) {
    %c0_i32 = arith.constant 0 : i32
    return %arg1, %arg0 : i32, i32
  }
}

</mosaic_0001>

<llo_original>
// kernel: tpu_custom_call.1
$region0: #{tpu_custom_call.1}
  #allocation0 [shape = 'u32[]', space=smem, size = 0x4, offset = 0x4, fixed_abs, tag = 'smem constant byte address 0x4 - core index']
  #allocation1 [shape = 'u32[72,128]{1,0:T(1,128)}', space=vmem, size = 0x9000, scoped, tag = 'internal scratch']
  %s0 = inlined_call_operand.hbm [shape: f32[8,512], index: 0, kind: input, shape index: {}, may-alias: {0,2}]
  %s1 = inlined_call_operand.vmem [shape: s32[8,1], index: 1, kind: input, shape index: {}]
  %s2 = inlined_call_operand.hbm [shape: f32[8,512], index: 2, kind: output, shape index: {}, may-alias: {0,2}]
  %s3 = sld [smem:[#allocation0]]
  $region22: #{tpu_custom_call.1} parent=0
    _
  %s5 = ssub.s32 1, %s3
  %s6 = scalar_select 0, %s5, %s3
  $region1: #{tpu_custom_call.1} parent=0
    #allocation2 [shape = 'u8[16384]{0}', space=vmem, size = 0x4000, scoped, tag = 'input window, operand 0, single buffered']
    #allocation3 [shape = 's32[1]{0}', space=sflag, size = 0x4, scoped, tag = 'scoped memory for tpu_custom_call.1']
    #allocation4 [shape = 's32[1]{0}', space=sflag, size = 0x4, scoped, tag = 'scoped memory for tpu_custom_call.1']
    #allocation5 [shape = 'u8[16384]{0}', space=vmem, size = 0x4000, scoped, tag = 'output window, operand 0, single buffered']
    %7 = vsyncpa [#allocation3], 0
    %8 = vsyncpa [#allocation4], 0
    // Predicated region
    $region2: #{tpu_custom_call.1} parent=1 // pred_check
      _
    $region3: #{tpu_custom_call.1} parent=1 // pred_check_branch
      %10 = sbr.rel (0) target = $region5
    $region4: #{tpu_custom_call.1} parent=1 // pred_region
      %12 = vsyncadd [#allocation3], 0
      %s14 = sshll.u32 %s0, 4
      %s15 = int_to_ptr.hbm [resolvable:$true] %s14
      %s16 = sshll.u32 [#allocation2], 4
      %s17 = int_to_ptr.vmem [resolvable:$true] %s16
      %19 = dma.hbm_to_vmem [thread:$0]  %s15, 512, %s17, [#allocation3]
    $region5: #{tpu_custom_call.1} parent=1 // pred_fallthru
      _
    // Predicated region
    $region6: #{tpu_custom_call.1} parent=1 // pred_check
      _
    $region7: #{tpu_custom_call.1} parent=1 // pred_check_branch
      %21 = sbr.rel (0) target = $region9
    $region8: #{tpu_custom_call.1} parent=1 // pred_region
      _
    $region9: #{tpu_custom_call.1} parent=1 // pred_fallthru
      _
    // Predicated region
    $region10: #{tpu_custom_call.1} parent=1 // pred_check
      _
    $region11: #{tpu_custom_call.1} parent=1 // pred_check_branch
      %23 = sbr.rel (0) target = $region13
    $region12: #{tpu_custom_call.1} parent=1 // pred_region
      %25 = dma.done [#allocation3], 512
    $region13: #{tpu_custom_call.1} parent=1 // pred_fallthru
      _
    %v26 = vld [vmem:[#allocation2] sm:$0xff]
    %v27 = vld [vmem:[#allocation2 + $0x8] sm:$0xff]
    %v28 = vld [vmem:[#allocation2 + $0x10] sm:$0xff]
    %v29 = vld [vmem:[#allocation2 + $0x18] sm:$0xff]
    %v30 = vld [vmem:[%s1] sm:$0xff]
    %s31 = smul.u32 0, 512
    %v32 = vstv %s31
    %v33 = vsub.s32 %v30, %v32
    %v34 = vlaneseq
    %v35 = vand.u32 %v34, 127
    %v36 = vadd.s32 %v35, 128
    %v37 = vadd.s32 %v35, 256
    %v38 = vadd.s32 %v35, 384
    %39 = vset.pattern.permute.xlu0 0
    %40 = vperm.xlu0 %39, %v33
    %v41 = vpop.permute.xlu0 %40
    %vm42 = vcmp.eq.s32.totalorder %v35, %v41
    %vm43 = vcmp.eq.s32.totalorder %v36, %v41
    %vm44 = vcmp.eq.s32.totalorder %v37, %v41
    %vm45 = vcmp.eq.s32.totalorder %v38, %v41
    %v46 = vsel %vm42, 0.4, 0.0
    %v47 = vsel %vm43, 0.4, 0.0
    %v48 = vsel %vm44, 0.4, 0.0
    %v49 = vsel %vm45, 0.4, 0.0
    %v50 = vsub.f32 %v26, %v46
    %v51 = vsub.f32 %v27, %v47
    %v52 = vsub.f32 %v28, %v48
    %v53 = vsub.f32 %v29, %v49
    %v54 = vmul.f32 %v50, 64.0
    %v55 = vmul.f32 %v51, 64.0
    %v56 = vmul.f32 %v52, 64.0
    %v57 = vmul.f32 %v53, 64.0
    %58 = vst [vmem:[#allocation5] sm:$0xff] %v54
    %59 = vst [vmem:[#allocation5 + $0x8] sm:$0xff] %v55
    %60 = vst [vmem:[#allocation5 + $0x10] sm:$0xff] %v56
    %61 = vst [vmem:[#allocation5 + $0x18] sm:$0xff] %v57
    // Predicated region
    $region14: #{tpu_custom_call.1} parent=1 // pred_check
      _
    $region15: #{tpu_custom_call.1} parent=1 // pred_check_branch
      %63 = sbr.rel (0) target = $region17
    $region16: #{tpu_custom_call.1} parent=1 // pred_region
      %65 = vsyncadd [#allocation4], 0
      %s67 = sshll.u32 [#allocation5], 4
      %s68 = int_to_ptr.vmem [resolvable:$true] %s67
      %s69 = sshll.u32 %s2, 4
      %s70 = int_to_ptr.hbm [resolvable:$true] %s69
      %72 = dma.vmem_to_hbm [thread:$0]  %s68, 512, %s70, [#allocation4]
    $region17: #{tpu_custom_call.1} parent=1 // pred_fallthru
      _
    // Predicated region
    $region18: #{tpu_custom_call.1} parent=1 // pred_check
      _
    $region19: #{tpu_custom_call.1} parent=1 // pred_check_branch
      %74 = sbr.rel (0) target = $region21
    $region20: #{tpu_custom_call.1} parent=1 // pred_region
      %76 = dma.done [#allocation4], 512
    $region21: #{tpu_custom_call.1} parent=1 // pred_fallthru
      _
    %77 = vsyncpa [#allocation3], 1
    %78 = vsyncpa [#allocation4], 1

</llo_original>
